<compile_context>
chip_gen: v5e
topology: v5e:2x2
jax: 0.10.0
libtpu: 0.0.40
codegen_flags: <defaults>
</compile_context>

<pallas_src>
import jax
import jax.numpy as jnp
from jax.experimental import pallas as pl
from jax.experimental.pallas import tpu as pltpu


def _cnn_kernel(x_ref, w_ref, b_ref, o_ref):
    # x_ref: (TB*L, E)  bf16   flattened (batch, time) rows of embedded chars
    # w_ref: (F, E, Kp) bf16   one (E, Kp) matmul weight per filter tap
    # b_ref: (1, Kp)    f32    conv bias (zero-padded to Kp lanes)
    # o_ref: (TB, Kp)   f32    pooled output block
    tbl, _ = x_ref.shape
    num_taps = w_ref.shape[0]
    tb, kp = o_ref.shape
    seq_len = tbl // tb
    t_out = seq_len - num_taps + 1

    x2d = x_ref[...]                                        # (TB*L, E) bf16
    acc = None
    for f in range(num_taps):                               # small static unroll
        # Row-dense MXU matmul: (TB*L, E) @ (E, Kp) -> f32 accumulate.
        y = jnp.dot(x2d, w_ref[f], preferred_element_type=jnp.float32)
        # Align tap f on the K-wide result: row (b, t+f) contributes to time t.
        # L is a multiple of 8, so the reshape is sublane-tile aligned.
        y = y.reshape(tb, seq_len, kp)[:, f:f + t_out, :]   # (TB, T, Kp)
        acc = y if acc is None else acc + y

    # Max-pool over time first, then bias + ReLU (exact hoist: both monotone).
    pooled = jnp.max(acc, axis=1)                           # (TB, Kp)
    o_ref[...] = jnp.maximum(pooled + b_ref[...], 0.0).astype(o_ref.dtype)


def _pick_batch_block(batch, seq_len, emb, k_pad):
    # Rough per-batch-element VMEM footprint (bytes): double-buffered bf16 x
    # block + f32 tap product and accumulator + output rows.
    per_b = 4 * seq_len * emb + 8 * seq_len * k_pad + 8 * k_pad
    budget = 16 * 1024 * 1024          # headroom inside 32 MiB scoped VMEM (v7x-safe)
    tb = max(1, budget // per_b)
    if tb >= batch:
        return batch                   # single block == full array dims
    return max(8, (tb // 8) * 8)       # sublane-aligned batch tile when gridding


def cnn_forward(x_nchw, weight, bias, filter_size, *, batch_block=None):
    """x_nchw: [B, 1, L, E]; weight: [K, 1, F, E]; bias: [K] -> [B, K]."""
    B, C, L, E = x_nchw.shape
    assert C == 1
    K = weight.shape[0]
    F = int(filter_size)
    T = L - F + 1
    assert T >= 1
    assert L % 8 == 0, "seq length should be sublane aligned"

    Kp = ((K + 127) // 128) * 128      # pad kernel_num to full 128-lane width

    # Conv weight -> per-tap matmul weights (F, E, Kp); bf16 for the MXU.
    w_taps = jnp.transpose(weight[:, 0], (1, 2, 0))                    # (F, E, K)
    w_taps = jnp.pad(w_taps, ((0, 0), (0, 0), (0, Kp - K))).astype(jnp.bfloat16)
    b_mat = jnp.pad(bias.astype(jnp.float32), (0, Kp - K)).reshape(1, Kp)

    # Batch tile: as large as comfortably fits VMEM, multiple of 8 when tiling.
    if batch_block is None:
        TB = _pick_batch_block(B, L, E, Kp)
    else:
        TB = min(int(batch_block), B)
        if TB < B:
            TB = max(8, (TB // 8) * 8)
    Bp = ((B + TB - 1) // TB) * TB     # pad batch to a multiple of the tile

    x = x_nchw[:, 0, :, :]
    if Bp != B:
        x = jnp.pad(x, ((0, Bp - B), (0, 0), (0, 0)))
    x2d = x.reshape(Bp * L, E).astype(jnp.bfloat16)                    # (Bp*L, E)

    grid = (Bp // TB,)
    cost = pl.CostEstimate(
        flops=2 * Bp * L * E * Kp * F,
        transcendentals=0,
        bytes_accessed=2 * Bp * L * E + 2 * F * E * Kp + 4 * Kp + 4 * Bp * Kp,
    )

    out = pl.pallas_call(
        _cnn_kernel,
        out_shape=jax.ShapeDtypeStruct((Bp, Kp), jnp.float32),
        grid_spec=pltpu.PrefetchScalarGridSpec(
            num_scalar_prefetch=0,
            grid=grid,
            in_specs=[
                pl.BlockSpec((TB * L, E), lambda i: (i, 0)),
                pl.BlockSpec((F, E, Kp), lambda i: (0, 0, 0)),
                pl.BlockSpec((1, Kp), lambda i: (0, 0)),
            ],
            out_specs=pl.BlockSpec((TB, Kp), lambda i: (i, 0)),
        ),
        compiler_params=pltpu.CompilerParams(
            dimension_semantics=("parallel",),
            vmem_limit_bytes=32 * 1024 * 1024,
        ),
        cost_estimate=cost,
    )(x2d, w_taps, b_mat)

    return out[:B, :K]                                                 # [B, K]


def reference_forward(x_nchw, weight, bias, filter_size):
    """Pure-JAX f32 reference matching the PyTorch semantics (dropout = identity)."""
    B, _, L, E = x_nchw.shape
    K = weight.shape[0]
    F = int(filter_size)
    T = L - F + 1
    x = x_nchw[:, 0]                                                   # [B, L, E]
    outs = []
    for t in range(T):
        win = x[:, t:t + F, :].reshape(B, F * E)                       # [B, F*E]
        outs.append(win @ weight.reshape(K, F * E).T + bias)
    conv = jnp.stack(outs, axis=1)                                     # [B, T, K]
    conv = jnp.maximum(conv, 0.0)
    return jnp.max(conv, axis=1)                                       # [B, K]


if __name__ == "__main__":
    # Small shapes consistent with the module:
    #   embedding_size E = 32, kernel_num K = 8, filter_size F = 3,
    #   batch B = 10, char-seq length L = 16, dropout p unused at inference.
    # batch_block=8 exercises the multi-step grid (2 blocks) and batch padding.
    B, L, E = 10, 16, 32
    K, F = 8, 3

    key = jax.random.PRNGKey(0)
    kx, kw, kb = jax.random.split(key, 3)

    x = jax.random.normal(kx, (B, 1, L, E), dtype=jnp.float32)

    fan_in = 1 * F * E
    fan_out = K * F * E
    limit = float(jnp.sqrt(6.0 / (fan_in + fan_out)))
    weight = jax.random.uniform(kw, (K, 1, F, E), jnp.float32, -limit, limit)
    bias = 0.1 * jax.random.normal(kb, (K,), dtype=jnp.float32)

    out = cnn_forward(x, weight, bias, F, batch_block=8)
    out = jax.block_until_ready(out)

    ref = reference_forward(x, weight, bias, F)
    assert out.shape == (B, K)
    # bf16 MXU operands with f32 accumulation -> relaxed tolerance.
    assert jnp.allclose(out, ref, atol=3e-2, rtol=3e-2), \
        float(jnp.max(jnp.abs(out - ref)))
    print("KERNEL_OK")
</pallas_src>

<mosaic_0001>
module attributes {stable_mosaic.version = 11 : i64} {
  func.func @_cnn_kernel(%arg0: i32, %arg1: memref<128x32xbf16, #tpu.memory_space<vmem>>, %arg2: memref<3x32x128xbf16, #tpu.memory_space<vmem>>, %arg3: memref<1x128xf32, #tpu.memory_space<vmem>>, %arg4: memref<8x128xf32, #tpu.memory_space<vmem>>) attributes {dimension_semantics = [#tpu.dimension_semantics<parallel>], iteration_bounds = array<i64: 2>, scalar_prefetch = 0 : i64, scratch_operands = 0 : i64, tpu.core_type = #tpu.core_type<tc>, window_params = [{transform_indices = @transform_0, window_bounds = array<i64: 128, 32>}, {pipeline_mode = #tpu.pipeline_mode<synchronous>, transform_indices = @transform_1, window_bounds = array<i64: 3, 32, 128>}, {pipeline_mode = #tpu.pipeline_mode<synchronous>, transform_indices = @transform_2, window_bounds = array<i64: 1, 128>}, {transform_indices = @transform_3, window_bounds = array<i64: 8, 128>}]} {
    %c0 = arith.constant 0 : index
    %c0_0 = arith.constant 0 : index
    %0 = vector.load %arg1[%c0, %c0_0] : memref<128x32xbf16, #tpu.memory_space<vmem>>, vector<128x32xbf16>
    %c0_1 = arith.constant 0 : index
    %c0_2 = arith.constant 0 : index
    %c0_3 = arith.constant 0 : index
    %1 = vector.load %arg2[%c0_1, %c0_2, %c0_3] : memref<3x32x128xbf16, #tpu.memory_space<vmem>>, vector<1x32x128xbf16>
    %2 = vector.shape_cast %1 : vector<1x32x128xbf16> to vector<32x128xbf16>
    %cst = arith.constant dense<0.000000e+00> : vector<128x128xf32>
    %3 = tpu.matmul %0, %2, %cst {dimension_numbers = #tpu.dot_dimension_numbers<[1], [0], [0], [1], [0, 0, 1, 1], [], []>} : vector<128x32xbf16>, vector<32x128xbf16>, vector<128x128xf32> -> vector<128x128xf32>
    %4 = vector.shape_cast %3 : vector<128x128xf32> to vector<8x16x128xf32>
    %5 = vector.extract_strided_slice %4 {offsets = [0, 0, 0], sizes = [8, 14, 128], strides = [1, 1, 1]} : vector<8x16x128xf32> to vector<8x14x128xf32>
    %c1 = arith.constant 1 : index
    %c0_4 = arith.constant 0 : index
    %c0_5 = arith.constant 0 : index
    %6 = vector.load %arg2[%c1, %c0_4, %c0_5] : memref<3x32x128xbf16, #tpu.memory_space<vmem>>, vector<1x32x128xbf16>
    %7 = vector.shape_cast %6 : vector<1x32x128xbf16> to vector<32x128xbf16>
    %cst_6 = arith.constant dense<0.000000e+00> : vector<128x128xf32>
    %8 = tpu.matmul %0, %7, %cst_6 {dimension_numbers = #tpu.dot_dimension_numbers<[1], [0], [0], [1], [0, 0, 1, 1], [], []>} : vector<128x32xbf16>, vector<32x128xbf16>, vector<128x128xf32> -> vector<128x128xf32>
    %9 = vector.shape_cast %8 : vector<128x128xf32> to vector<8x16x128xf32>
    %10 = vector.extract_strided_slice %9 {offsets = [0, 1, 0], sizes = [8, 14, 128], strides = [1, 1, 1]} : vector<8x16x128xf32> to vector<8x14x128xf32>
    %11 = arith.addf %5, %10 : vector<8x14x128xf32>
    %c2 = arith.constant 2 : index
    %c0_7 = arith.constant 0 : index
    %c0_8 = arith.constant 0 : index
    %12 = vector.load %arg2[%c2, %c0_7, %c0_8] : memref<3x32x128xbf16, #tpu.memory_space<vmem>>, vector<1x32x128xbf16>
    %13 = vector.shape_cast %12 : vector<1x32x128xbf16> to vector<32x128xbf16>
    %cst_9 = arith.constant dense<0.000000e+00> : vector<128x128xf32>
    %14 = tpu.matmul %0, %13, %cst_9 {dimension_numbers = #tpu.dot_dimension_numbers<[1], [0], [0], [1], [0, 0, 1, 1], [], []>} : vector<128x32xbf16>, vector<32x128xbf16>, vector<128x128xf32> -> vector<128x128xf32>
    %15 = vector.shape_cast %14 : vector<128x128xf32> to vector<8x16x128xf32>
    %16 = vector.extract_strided_slice %15 {offsets = [0, 2, 0], sizes = [8, 14, 128], strides = [1, 1, 1]} : vector<8x16x128xf32> to vector<8x14x128xf32>
    %17 = arith.addf %11, %16 : vector<8x14x128xf32>
    %cst_10 = arith.constant dense<0xFF800000> : vector<8x128xf32>
    %18 = vector.multi_reduction <maximumf>, %17, %cst_10 [1] : vector<8x14x128xf32> to vector<8x128xf32>
    %c0_11 = arith.constant 0 : index
    %c0_12 = arith.constant 0 : index
    %19 = vector.load %arg3[%c0_11, %c0_12] : memref<1x128xf32, #tpu.memory_space<vmem>>, vector<1x128xf32>
    %20 = vector.broadcast %19 : vector<1x128xf32> to vector<8x128xf32>
    %21 = arith.addf %18, %20 : vector<8x128xf32>
    %cst_13 = arith.constant 0.000000e+00 : f32
    %22 = vector.broadcast %cst_13 : f32 to vector<8x128xf32>
    %23 = arith.maximumf %21, %22 : vector<8x128xf32>
    %c0_14 = arith.constant 0 : index
    %c0_15 = arith.constant 0 : index
    %24 = vector.load %arg4[%c0_14, %c0_15] : memref<8x128xf32, #tpu.memory_space<vmem>>, vector<8x128xf32>
    tpu.vector_store %arg4[%c0_14, %c0_15], %23 {strides = array<i32>} : memref<8x128xf32, #tpu.memory_space<vmem>>, vector<8x128xf32>,
    return
  }
  func.func @transform_0(%arg0: i32) -> (i32, i32) {
    %c0_i32 = arith.constant 0 : i32
    %c0_i32_0 = arith.constant 0 : i32
    return %arg0, %c0_i32 : i32, i32
  }
  func.func @transform_1(%arg0: i32) -> (i32, i32, i32) {
    %c0_i32 = arith.constant 0 : i32
    %c0_i32_0 = arith.constant 0 : i32
    %c0_i32_1 = arith.constant 0 : i32
    %c0_i32_2 = arith.constant 0 : i32
    return %c0_i32, %c0_i32_0, %c0_i32_1 : i32, i32, i32
  }
  func.func @transform_2(%arg0: i32) -> (i32, i32) {
    %c0_i32 = arith.constant 0 : i32
    %c0_i32_0 = arith.constant 0 : i32
    %c0_i32_1 = arith.constant 0 : i32
    return %c0_i32, %c0_i32_0 : i32, i32
  }
  func.func @transform_3(%arg0: i32) -> (i32, i32) {
    %c0_i32 = arith.constant 0 : i32
    %c0_i32_0 = arith.constant 0 : i32
    return %arg0, %c0_i32 : i32, i32
  }
}

</mosaic_0001>

<llo_original>
// kernel: tpu_custom_call.1
$region0: #{tpu_custom_call.1}
  #allocation0 [shape = 'u32[]', space=smem, size = 0x4, offset = 0x4, fixed_abs, tag = 'smem constant byte address 0x4 - core index']
  #allocation1 [shape = 'u32[72,128]{1,0:T(1,128)}', space=vmem, size = 0x9000, scoped, tag = 'internal scratch']
  %s0 = inlined_call_operand.vmem [shape: bf16[256,32], index: 0, kind: input, shape index: {}]
  %s1 = inlined_call_operand.vmem [shape: bf16[3,32,128], index: 1, kind: input, shape index: {}]
  %s2 = inlined_call_operand.vmem [shape: f32[1,128], index: 2, kind: input, shape index: {}]
  %s3 = inlined_call_operand.hbm [shape: f32[16,128], index: 3, kind: output, shape index: {}]
  %s4 = sld [smem:[#allocation0]]
  $region45: #{tpu_custom_call.1} parent=0
    _
  %s6 = ssub.s32 1, %s4
  %s7 = scalar_select 0, %s6, %s4
  $region1: #{tpu_custom_call.1} parent=0
    #allocation2 [shape = 'u8[8192]{0}', space=vmem, size = 0x2000, scoped, tag = 'output window, operand 0']
    #allocation3 [shape = 's32[2]{0}', space=sflag, size = 0x8, scoped, tag = 'scoped memory for tpu_custom_call.1']
    %8 = vsyncpa [#allocation3], 0
    %s9 = scalar_lea.sflag [#allocation3], 1
    %10 = vsyncpa %s9, 0
    loop: start=0, step=1, limit=4
    $region2: #{tpu_custom_call.1} parent=1 // loop_pre_header
      _
    $region3: #{tpu_custom_call.1} parent=1 // loop_header
      %s12 = sphi 0, %s16
      %p13 = scmp.ge.s32.totalorder %s12, 4
      %s22 = sphi 0, %s24
      %s25 = sphi 0, %s22
      %s26 = sphi 0, %s25
      %s42 = sphi 0, %s26
      %s46 = sphi 0, %s46
      %s48 = sphi 0, %s46
      %s49 = sphi 0, %s48
      %s63 = sphi 0, %s49
      %s67 = sphi 0, %s67
      %s69 = sphi 0, %s67
      %s70 = sphi 0, %s69
      %s84 = sphi 0, %s70
      %s90 = sphi 0, %s92
      %s93 = sphi 0, %s90
      %s94 = sphi 0, %s93
      %s110 = sphi 0, %s94
    $region4: #{tpu_custom_call.1} parent=1 // loop_header_branch
      %15 = sbr.rel (%p13) target = $region8
    $region5: #{tpu_custom_call.1} parent=1 // loop_body
      %s17 = ssub.s32 %s12, 1
      %s18 = ssub.s32 %s12, 2
      %s19 = sadd.s32 %s12, 1
      %s20 = ssub.s32 %s12, %s19
      %p21 = scmp.eq.s32.totalorder %s20, 0
      %s23 = sadd.s32 %s22, 1
      %s24 = scalar_select %p21, %s22, %s23
      %p27 = pneg %p21
      %p28 = scmp.eq.s32.totalorder %s12, 1
      %p29 = por %p27, %p28
      %p30 = scmp.ne.s32.totalorder %s22, %s25
      %p31 = scmp.eq.s32.totalorder %s12, 0
      %p32 = por %p30, %p31
      %p33 = scmp.ne.s32.totalorder %s22, %s25
      %p34 = scmp.eq.s32.totalorder %s17, 1
      %p35 = por %p33, %p34
      %p36 = scmp.ne.s32.totalorder %s25, %s26
      %p37 = scmp.eq.s32.totalorder %s17, 0
      %p38 = por %p36, %p37
      %p39 = scmp.ne.s32.totalorder %s25, %s26
      %p40 = scmp.eq.s32.totalorder %s18, 1
      %p41 = por %p39, %p40
      %p43 = scmp.ne.s32.totalorder %s26, %s42
      %p44 = scmp.eq.s32.totalorder %s18, 0
      %p45 = por %p43, %p44
      %s47 = sadd.s32 %s46, 1
      %p50 = scmp.eq.s32.totalorder %s12, 1
      %p51 = scmp.ne.s32.totalorder %s46, %s48
      %p52 = scmp.eq.s32.totalorder %s12, 0
      %p53 = por %p51, %p52
      %p54 = scmp.ne.s32.totalorder %s46, %s48
      %p55 = scmp.eq.s32.totalorder %s17, 1
      %p56 = por %p54, %p55
      %p57 = scmp.ne.s32.totalorder %s48, %s49
      %p58 = scmp.eq.s32.totalorder %s17, 0
      %p59 = por %p57, %p58
      %p60 = scmp.ne.s32.totalorder %s48, %s49
      %p61 = scmp.eq.s32.totalorder %s18, 1
      %p62 = por %p60, %p61
      %p64 = scmp.ne.s32.totalorder %s49, %s63
      %p65 = scmp.eq.s32.totalorder %s18, 0
      %p66 = por %p64, %p65
      %s68 = sadd.s32 %s67, 1
      %p71 = scmp.eq.s32.totalorder %s12, 1
      %p72 = scmp.ne.s32.totalorder %s67, %s69
      %p73 = scmp.eq.s32.totalorder %s12, 0
      %p74 = por %p72, %p73
      %p75 = scmp.ne.s32.totalorder %s67, %s69
      %p76 = scmp.eq.s32.totalorder %s17, 1
      %p77 = por %p75, %p76
      %p78 = scmp.ne.s32.totalorder %s69, %s70
      %p79 = scmp.eq.s32.totalorder %s17, 0
      %p80 = por %p78, %p79
      %p81 = scmp.ne.s32.totalorder %s69, %s70
      %p82 = scmp.eq.s32.totalorder %s18, 1
      %p83 = por %p81, %p82
      %p85 = scmp.ne.s32.totalorder %s70, %s84
      %p86 = scmp.eq.s32.totalorder %s18, 0
      %p87 = por %p85, %p86
      %s88 = ssub.s32 %s12, %s19
      %p89 = scmp.eq.s32.totalorder %s88, 0
      %s91 = sadd.s32 %s90, 1
      %s92 = scalar_select %p89, %s90, %s91
      %p95 = pneg %p89
      %p96 = scmp.eq.s32.totalorder %s12, 1
      %p97 = por %p95, %p96
      %p98 = scmp.ne.s32.totalorder %s90, %s93
      %p99 = scmp.eq.s32.totalorder %s12, 0
      %p100 = por %p98, %p99
      %p101 = scmp.ne.s32.totalorder %s90, %s93
      %p102 = scmp.eq.s32.totalorder %s17, 1
      %p103 = por %p101, %p102
      %p104 = scmp.ne.s32.totalorder %s93, %s94
      %p105 = scmp.eq.s32.totalorder %s17, 0
      %p106 = por %p104, %p105
      %p107 = scmp.ne.s32.totalorder %s93, %s94
      %p108 = scmp.eq.s32.totalorder %s18, 1
      %p109 = por %p107, %p108
      %p111 = scmp.ne.s32.totalorder %s94, %s110
      %p112 = scmp.eq.s32.totalorder %s18, 0
      %p113 = por %p111, %p112
      %p114 = scmp.le.s32.totalorder 1, %s12
      %p115 = scmp.lt.s32.totalorder %s12, 3
      %p116 = pnand %p114, %p115
      %p117 = pneg %p116
      // Predicated region
      $region9: #{tpu_custom_call.1} parent=5 // pred_check
        _
      $region10: #{tpu_custom_call.1} parent=5 // pred_check_branch
        %119 = sbr.rel (%p116) target = $region12
      $region11: #{tpu_custom_call.1} parent=5 // pred_region
        %s120 = ssub.s32 %s12, 1
        // Predicated region
        $region13: #{tpu_custom_call.1} parent=11 // pred_check
          %p121 = pneg %p59
        $region14: #{tpu_custom_call.1} parent=11 // pred_check_branch
          %123 = sbr.rel (%p121) target = $region16
        $region15: #{tpu_custom_call.1} parent=11 // pred_region
          _
        $region16: #{tpu_custom_call.1} parent=11 // pred_fallthru
          _
        // Predicated region
        $region17: #{tpu_custom_call.1} parent=11 // pred_check
          %p124 = pneg %p80
        $region18: #{tpu_custom_call.1} parent=11 // pred_check_branch
          %126 = sbr.rel (%p124) target = $region20
        $region19: #{tpu_custom_call.1} parent=11 // pred_region
          _
        $region20: #{tpu_custom_call.1} parent=11 // pred_fallthru
          _
      $region12: #{tpu_custom_call.1} parent=5 // pred_fallthru
        _
      %p127 = scmp.lt.s32.totalorder %s12, 2
      // Predicated region
      $region21: #{tpu_custom_call.1} parent=5 // pred_check
        %p128 = pneg %p127
      $region22: #{tpu_custom_call.1} parent=5 // pred_check_branch
        %130 = sbr.rel (%p128) target = $region24
      $region23: #{tpu_custom_call.1} parent=5 // pred_region
        // Predicated region
        $region25: #{tpu_custom_call.1} parent=23 // pred_check
          %p131 = pneg %p32
        $region26: #{tpu_custom_call.1} parent=23 // pred_check_branch
          %133 = sbr.rel (%p131) target = $region28
        $region27: #{tpu_custom_call.1} parent=23 // pred_region
          %s134 = smul.u32 16, %s12
          %p135 = scmp.lt.s32.totalorder %s134, 31
          %s136 = scalar_select %p135, %s134, 31
          %s137 = smul.addr %s136, 4
          %s138 = scalar_lea.vmem %s0, %s137
          %s139 = smul.u32 16, %s12
        $region28: #{tpu_custom_call.1} parent=23 // pred_fallthru
          _
      $region24: #{tpu_custom_call.1} parent=5 // pred_fallthru
        _
      %p140 = scmp.le.s32.totalorder 1, %s12
      %p141 = scmp.lt.s32.totalorder %s12, 3
      %p142 = pnand %p140, %p141
      %p143 = pneg %p142
      // Predicated region
      $region29: #{tpu_custom_call.1} parent=5 // pred_check
        _
      $region30: #{tpu_custom_call.1} parent=5 // pred_check_branch
        %145 = sbr.rel (%p142) target = $region32
      $region31: #{tpu_custom_call.1} parent=5 // pred_region
        %s146 = ssub.s32 %s12, 1
        %s147 = smul.u32 16, %s17
        %p148 = scmp.lt.s32.totalorder %s147, 31
        %s149 = scalar_select %p148, %s147, 31
        %s150 = smul.addr %s149, 4
        %s151 = scalar_lea.vmem %s0, %s150
        %p152 = pneg %p38
        %p153 = pneg %p35
        %p154 = pneg %p59
        %p155 = pneg %p56
        %p156 = pneg %p80
        %p157 = pneg %p77
        %p158 = pneg %p106
        %p159 = pneg %p103
        %s160 = sand.u32 %s93, 1
        %s161 = scalar_lea.sflag [#allocation3], %s160
        %s162 = sand.u32 %s93, 1
        %s163 = smul.addr %s162, 8
        %s164 = scalar_lea.vmem [#allocation2], %s163
        %s165 = smul.u32 16, %s17
        %p166 = scmp.lt.s32.totalorder %s165, 31
        %s167 = scalar_select %p166, %s165, 31
        %s168 = smul.addr %s167, 4
        %s169 = scalar_lea.vmem %s0, %s168
        %s170 = smul.u32 16, %s17
        %v172 = vld [vmem:[%s169] sm:$0xf]
        %v173 = vld [vmem:[%s169 + $0x4] sm:$0xf]
        %v174 = vld [vmem:[%s169 + $0x8] sm:$0xf]
        %v175 = vld [vmem:[%s169 + $0xc] sm:$0xf]
        %v176 = vld [vmem:[%s169 + $0x10] sm:$0xf]
        %v177 = vld [vmem:[%s169 + $0x14] sm:$0xf]
        %v178 = vld [vmem:[%s169 + $0x18] sm:$0xf]
        %v179 = vld [vmem:[%s169 + $0x1c] sm:$0xf]
        %v180 = vld [vmem:[%s169 + $0x20] sm:$0xf]
        %v181 = vld [vmem:[%s169 + $0x24] sm:$0xf]
        %v182 = vld [vmem:[%s169 + $0x28] sm:$0xf]
        %v183 = vld [vmem:[%s169 + $0x2c] sm:$0xf]
        %v184 = vld [vmem:[%s169 + $0x30] sm:$0xf]
        %v185 = vld [vmem:[%s169 + $0x34] sm:$0xf]
        %v186 = vld [vmem:[%s169 + $0x38] sm:$0xf]
        %v187 = vld [vmem:[%s169 + $0x3c] sm:$0xf]
        %v188 = vld [vmem:[%s1] sm:$0xf]
        %v189 = vld [vmem:[%s1 + $0x4] sm:$0xf]
        %v190 = vld [vmem:[%s1 + $0x8] sm:$0xf]
        %v191 = vld [vmem:[%s1 + $0xc] sm:$0xf]
        %v208 = vunpack.c.l.b16 %v172
        %v209 = vunpack.c.l.b16 %v173
        %v210 = vunpack.c.l.b16 %v174
        %v211 = vunpack.c.l.b16 %v175
        %v212 = vunpack.c.l.b16 %v176
        %v213 = vunpack.c.l.b16 %v177
        %v214 = vunpack.c.l.b16 %v178
        %v215 = vunpack.c.l.b16 %v179
        %v216 = vunpack.c.l.b16 %v180
        %v217 = vunpack.c.l.b16 %v181
        %v218 = vunpack.c.l.b16 %v182
        %v219 = vunpack.c.l.b16 %v183
        %v220 = vunpack.c.l.b16 %v184
        %v221 = vunpack.c.l.b16 %v185
        %v222 = vunpack.c.l.b16 %v186
        %v223 = vunpack.c.l.b16 %v187
        %v224 = vpack.c.b16 %v209, %v208
        %v225 = vpack.c.b16 %v211, %v210
        %v226 = vpack.c.b16 %v213, %v212
        %v227 = vpack.c.b16 %v215, %v214
        %v228 = vpack.c.b16 %v217, %v216
        %v229 = vpack.c.b16 %v219, %v218
        %v230 = vpack.c.b16 %v221, %v220
        %v231 = vpack.c.b16 %v223, %v222
        %v236 = vunpack.c.l.b16 %v188
        %v237 = vunpack.c.l.b16 %v189
        %v238 = vunpack.c.l.b16 %v190
        %v239 = vunpack.c.l.b16 %v191
        %v240 = vpack.c.b16 %v237, %v236
        %v241 = vpack.c.b16 %v239, %v238
        %vm244 = vcmask 261120
        %v246 = vsel %vm244, %v224, 0
        %v249 = vsel %vm244, %v225, 0
        %v252 = vsel %vm244, %v226, 0
        %v255 = vsel %vm244, %v227, 0
        %v258 = vsel %vm244, %v228, 0
        %v261 = vsel %vm244, %v229, 0
        %v264 = vsel %vm244, %v230, 0
        %v267 = vsel %vm244, %v231, 0
        %269 = vmatpush.bf16.msra.mxu0 0
        %270 = vmatpush.bf16.msra.mxu0 0
        %271 = vmatpush.bf16.msra.mxu0 0
        %272 = vmatpush.bf16.msra.mxu0 0
        %273 = vmatpush.bf16.msra.mxu0 0
        %274 = vmatpush.bf16.msra.mxu0 0
        %275 = vmatpush.bf16.msra.mxu0 %v241
        %276 = vmatpush.bf16.msra.mxu0 %v240
        %277 = vmatmul.bf16.gmra.mxu0 %v246
        %v278 = vpop.f32.mrf.mxu0
        %v279 = vadd.f32 0.0, %v278
        %v280 = vpop.f32.mrf.mxu0
        %v281 = vadd.f32 0.0, %v280
        %282 = vmatmul.bf16.gmra.mxu0 %v249
        %v283 = vpop.f32.mrf.mxu0
        %v284 = vadd.f32 0.0, %v283
        %v285 = vpop.f32.mrf.mxu0
        %v286 = vadd.f32 0.0, %v285
        %287 = vmatmul.bf16.gmra.mxu0 %v252
        %v288 = vpop.f32.mrf.mxu0
        %v289 = vadd.f32 0.0, %v288
        %v290 = vpop.f32.mrf.mxu0
        %v291 = vadd.f32 0.0, %v290
        %292 = vmatmul.bf16.gmra.mxu0 %v255
        %v293 = vpop.f32.mrf.mxu0
        %v294 = vadd.f32 0.0, %v293
        %v295 = vpop.f32.mrf.mxu0
        %v296 = vadd.f32 0.0, %v295
        %297 = vmatmul.bf16.gmra.mxu0 %v258
        %v298 = vpop.f32.mrf.mxu0
        %v299 = vadd.f32 0.0, %v298
        %v300 = vpop.f32.mrf.mxu0
        %v301 = vadd.f32 0.0, %v300
        %302 = vmatmul.bf16.gmra.mxu0 %v261
        %v303 = vpop.f32.mrf.mxu0
        %v304 = vadd.f32 0.0, %v303
        %v305 = vpop.f32.mrf.mxu0
        %v306 = vadd.f32 0.0, %v305
        %307 = vmatmul.bf16.gmra.mxu0 %v264
        %v308 = vpop.f32.mrf.mxu0
        %v309 = vadd.f32 0.0, %v308
        %v310 = vpop.f32.mrf.mxu0
        %v311 = vadd.f32 0.0, %v310
        %312 = vmatmul.bf16.gmra.mxu0 %v267
        %v313 = vpop.f32.mrf.mxu0
        %v314 = vadd.f32 0.0, %v313
        %v315 = vpop.f32.mrf.mxu0
        %v316 = vadd.f32 0.0, %v315
        %317 = vdwg.mxu0
        %s318 = scalar_lea.vmem %s1, 16
        %v319 = vld [vmem:[%s318] sm:$0xf]
        %v320 = vld [vmem:[%s318 + $0x4] sm:$0xf]
        %v321 = vld [vmem:[%s318 + $0x8] sm:$0xf]
        %v322 = vld [vmem:[%s318 + $0xc] sm:$0xf]
        %v327 = vunpack.c.l.b16 %v319
        %v328 = vunpack.c.l.b16 %v320
        %v329 = vunpack.c.l.b16 %v321
        %v330 = vunpack.c.l.b16 %v322
        %v331 = vpack.c.b16 %v328, %v327
        %v332 = vpack.c.b16 %v330, %v329
        %335 = vmatpush.bf16.msra.mxu0 0
        %336 = vmatpush.bf16.msra.mxu0 0
        %337 = vmatpush.bf16.msra.mxu0 0
        %338 = vmatpush.bf16.msra.mxu0 0
        %339 = vmatpush.bf16.msra.mxu0 0
        %340 = vmatpush.bf16.msra.mxu0 0
        %341 = vmatpush.bf16.msra.mxu0 %v332
        %342 = vmatpush.bf16.msra.mxu0 %v331
        %343 = vmatmul.bf16.gmra.mxu0 %v246
        %v344 = vpop.f32.mrf.mxu0
        %v345 = vadd.f32 0.0, %v344
        %v346 = vpop.f32.mrf.mxu0
        %v347 = vadd.f32 0.0, %v346
        %348 = vmatmul.bf16.gmra.mxu0 %v249
        %v349 = vpop.f32.mrf.mxu0
        %v350 = vadd.f32 0.0, %v349
        %v351 = vpop.f32.mrf.mxu0
        %v352 = vadd.f32 0.0, %v351
        %353 = vmatmul.bf16.gmra.mxu0 %v252
        %v354 = vpop.f32.mrf.mxu0
        %v355 = vadd.f32 0.0, %v354
        %v356 = vpop.f32.mrf.mxu0
        %v357 = vadd.f32 0.0, %v356
        %358 = vmatmul.bf16.gmra.mxu0 %v255
        %v359 = vpop.f32.mrf.mxu0
        %v360 = vadd.f32 0.0, %v359
        %v361 = vpop.f32.mrf.mxu0
        %v362 = vadd.f32 0.0, %v361
        %363 = vmatmul.bf16.gmra.mxu0 %v258
        %v364 = vpop.f32.mrf.mxu0
        %v365 = vadd.f32 0.0, %v364
        %v366 = vpop.f32.mrf.mxu0
        %v367 = vadd.f32 0.0, %v366
        %368 = vmatmul.bf16.gmra.mxu0 %v261
        %v369 = vpop.f32.mrf.mxu0
        %v370 = vadd.f32 0.0, %v369
        %v371 = vpop.f32.mrf.mxu0
        %v372 = vadd.f32 0.0, %v371
        %373 = vmatmul.bf16.gmra.mxu0 %v264
        %v374 = vpop.f32.mrf.mxu0
        %v375 = vadd.f32 0.0, %v374
        %v376 = vpop.f32.mrf.mxu0
        %v377 = vadd.f32 0.0, %v376
        %378 = vmatmul.bf16.gmra.mxu0 %v267
        %v379 = vpop.f32.mrf.mxu0
        %v380 = vadd.f32 0.0, %v379
        %v381 = vpop.f32.mrf.mxu0
        %v382 = vadd.f32 0.0, %v381
        %383 = vdwg.mxu0
        %vm400 = vcmask 1046528
        %v401 = vrot.slane %v345, 1
        %v402 = vrot.slane %v347, 1
        %v403 = vsel %vm400, %v401, %v402
        %v404 = vrot.slane %v350, 1
        %v405 = vrot.slane %v352, 1
        %v406 = vsel %vm400, %v404, %v405
        %v407 = vrot.slane %v355, 1
        %v408 = vrot.slane %v357, 1
        %v409 = vsel %vm400, %v407, %v408
        %v410 = vrot.slane %v360, 1
        %v411 = vrot.slane %v362, 1
        %v412 = vsel %vm400, %v410, %v411
        %v413 = vrot.slane %v365, 1
        %v414 = vrot.slane %v367, 1
        %v415 = vsel %vm400, %v413, %v414
        %v416 = vrot.slane %v370, 1
        %v417 = vrot.slane %v372, 1
        %v418 = vsel %vm400, %v416, %v417
        %v419 = vrot.slane %v375, 1
        %v420 = vrot.slane %v377, 1
        %v421 = vsel %vm400, %v419, %v420
        %v422 = vrot.slane %v380, 1
        %v423 = vrot.slane %v382, 1
        %v424 = vsel %vm400, %v422, %v423
        %v441 = vadd.f32 %v279, %v403
        %v442 = vadd.f32 %v281, %v402
        %v443 = vadd.f32 %v284, %v406
        %v444 = vadd.f32 %v286, %v405
        %v445 = vadd.f32 %v289, %v409
        %v446 = vadd.f32 %v291, %v408
        %v447 = vadd.f32 %v294, %v412
        %v448 = vadd.f32 %v296, %v411
        %v449 = vadd.f32 %v299, %v415
        %v450 = vadd.f32 %v301, %v414
        %v451 = vadd.f32 %v304, %v418
        %v452 = vadd.f32 %v306, %v417
        %v453 = vadd.f32 %v309, %v421
        %v454 = vadd.f32 %v311, %v420
        %v455 = vadd.f32 %v314, %v424
        %v456 = vadd.f32 %v316, %v423
        %s457 = scalar_lea.vmem %s1, 32
        %v458 = vld [vmem:[%s457] sm:$0xf]
        %v459 = vld [vmem:[%s457 + $0x4] sm:$0xf]
        %v460 = vld [vmem:[%s457 + $0x8] sm:$0xf]
        %v461 = vld [vmem:[%s457 + $0xc] sm:$0xf]
        %v466 = vunpack.c.l.b16 %v458
        %v467 = vunpack.c.l.b16 %v459
        %v468 = vunpack.c.l.b16 %v460
        %v469 = vunpack.c.l.b16 %v461
        %v470 = vpack.c.b16 %v467, %v466
        %v471 = vpack.c.b16 %v469, %v468
        %474 = vmatpush.bf16.msra.mxu0 0
        %475 = vmatpush.bf16.msra.mxu0 0
        %476 = vmatpush.bf16.msra.mxu0 0
        %477 = vmatpush.bf16.msra.mxu0 0
        %478 = vmatpush.bf16.msra.mxu0 0
        %479 = vmatpush.bf16.msra.mxu0 0
        %480 = vmatpush.bf16.msra.mxu0 %v471
        %481 = vmatpush.bf16.msra.mxu0 %v470
        %482 = vmatmul.bf16.gmra.mxu0 %v246
        %v483 = vpop.f32.mrf.mxu0
        %v484 = vadd.f32 0.0, %v483
        %v485 = vpop.f32.mrf.mxu0
        %v486 = vadd.f32 0.0, %v485
        %487 = vmatmul.bf16.gmra.mxu0 %v249
        %v488 = vpop.f32.mrf.mxu0
        %v489 = vadd.f32 0.0, %v488
        %v490 = vpop.f32.mrf.mxu0
        %v491 = vadd.f32 0.0, %v490
        %492 = vmatmul.bf16.gmra.mxu0 %v252
        %v493 = vpop.f32.mrf.mxu0
        %v494 = vadd.f32 0.0, %v493
        %v495 = vpop.f32.mrf.mxu0
        %v496 = vadd.f32 0.0, %v495
        %497 = vmatmul.bf16.gmra.mxu0 %v255
        %v498 = vpop.f32.mrf.mxu0
        %v499 = vadd.f32 0.0, %v498
        %v500 = vpop.f32.mrf.mxu0
        %v501 = vadd.f32 0.0, %v500
        %502 = vmatmul.bf16.gmra.mxu0 %v258
        %v503 = vpop.f32.mrf.mxu0
        %v504 = vadd.f32 0.0, %v503
        %v505 = vpop.f32.mrf.mxu0
        %v506 = vadd.f32 0.0, %v505
        %507 = vmatmul.bf16.gmra.mxu0 %v261
        %v508 = vpop.f32.mrf.mxu0
        %v509 = vadd.f32 0.0, %v508
        %v510 = vpop.f32.mrf.mxu0
        %v511 = vadd.f32 0.0, %v510
        %512 = vmatmul.bf16.gmra.mxu0 %v264
        %v513 = vpop.f32.mrf.mxu0
        %v514 = vadd.f32 0.0, %v513
        %v515 = vpop.f32.mrf.mxu0
        %v516 = vadd.f32 0.0, %v515
        %517 = vmatmul.bf16.gmra.mxu0 %v267
        %v518 = vpop.f32.mrf.mxu0
        %v519 = vadd.f32 0.0, %v518
        %v520 = vpop.f32.mrf.mxu0
        %v521 = vadd.f32 0.0, %v520
        %522 = vdwg.mxu0
        %vm539 = vcmask 1045504
        %v540 = vrot.slane %v484, 2
        %v541 = vrot.slane %v486, 2
        %v542 = vsel %vm539, %v540, %v541
        %v543 = vrot.slane %v489, 2
        %v544 = vrot.slane %v491, 2
        %v545 = vsel %vm539, %v543, %v544
        %v546 = vrot.slane %v494, 2
        %v547 = vrot.slane %v496, 2
        %v548 = vsel %vm539, %v546, %v547
        %v549 = vrot.slane %v499, 2
        %v550 = vrot.slane %v501, 2
        %v551 = vsel %vm539, %v549, %v550
        %v552 = vrot.slane %v504, 2
        %v553 = vrot.slane %v506, 2
        %v554 = vsel %vm539, %v552, %v553
        %v555 = vrot.slane %v509, 2
        %v556 = vrot.slane %v511, 2
        %v557 = vsel %vm539, %v555, %v556
        %v558 = vrot.slane %v514, 2
        %v559 = vrot.slane %v516, 2
        %v560 = vsel %vm539, %v558, %v559
        %v561 = vrot.slane %v519, 2
        %v562 = vrot.slane %v521, 2
        %v563 = vsel %vm539, %v561, %v562
        %v580 = vadd.f32 %v441, %v542
        %v581 = vadd.f32 %v442, %v541
        %v582 = vadd.f32 %v443, %v545
        %v583 = vadd.f32 %v444, %v544
        %v584 = vadd.f32 %v445, %v548
        %v585 = vadd.f32 %v446, %v547
        %v586 = vadd.f32 %v447, %v551
        %v587 = vadd.f32 %v448, %v550
        %v588 = vadd.f32 %v449, %v554
        %v589 = vadd.f32 %v450, %v553
        %v590 = vadd.f32 %v451, %v557
        %v591 = vadd.f32 %v452, %v556
        %v592 = vadd.f32 %v453, %v560
        %v593 = vadd.f32 %v454, %v559
        %v594 = vadd.f32 %v455, %v563
        %v595 = vadd.f32 %v456, %v562
        %v596 = vsel %vm539, %v581, -inf
        %v597 = vmax.f32 %v580, %v596
        %v598 = vrot.slane %v597, 4
        %v599 = vmax.f32 %v597, %v598
        %v600 = vrot.slane %v599, 2
        %v601 = vmax.f32 %v599, %v600
        %v602 = vrot.slane %v601, 1
        %v603 = vmax.f32 %v601, %v602
        %v604 = vsel %vm539, %v583, -inf
        %v605 = vmax.f32 %v582, %v604
        %v606 = vrot.slane %v605, 4
        %v607 = vmax.f32 %v605, %v606
        %v608 = vrot.slane %v607, 2
        %v609 = vmax.f32 %v607, %v608
        %v610 = vrot.slane %v609, 1
        %v611 = vmax.f32 %v609, %v610
        %v612 = vsel %vm539, %v585, -inf
        %v613 = vmax.f32 %v584, %v612
        %v614 = vrot.slane %v613, 4
        %v615 = vmax.f32 %v613, %v614
        %v616 = vrot.slane %v615, 2
        %v617 = vmax.f32 %v615, %v616
        %v618 = vrot.slane %v617, 1
        %v619 = vmax.f32 %v617, %v618
        %v620 = vsel %vm539, %v587, -inf
        %v621 = vmax.f32 %v586, %v620
        %v622 = vrot.slane %v621, 4
        %v623 = vmax.f32 %v621, %v622
        %v624 = vrot.slane %v623, 2
        %v625 = vmax.f32 %v623, %v624
        %v626 = vrot.slane %v625, 1
        %v627 = vmax.f32 %v625, %v626
        %v628 = vsel %vm539, %v589, -inf
        %v629 = vmax.f32 %v588, %v628
        %v630 = vrot.slane %v629, 4
        %v631 = vmax.f32 %v629, %v630
        %v632 = vrot.slane %v631, 2
        %v633 = vmax.f32 %v631, %v632
        %v634 = vrot.slane %v633, 1
        %v635 = vmax.f32 %v633, %v634
        %v636 = vsel %vm539, %v591, -inf
        %v637 = vmax.f32 %v590, %v636
        %v638 = vrot.slane %v637, 4
        %v639 = vmax.f32 %v637, %v638
        %v640 = vrot.slane %v639, 2
        %v641 = vmax.f32 %v639, %v640
        %v642 = vrot.slane %v641, 1
        %v643 = vmax.f32 %v641, %v642
        %v644 = vsel %vm539, %v593, -inf
        %v645 = vmax.f32 %v592, %v644
        %v646 = vrot.slane %v645, 4
        %v647 = vmax.f32 %v645, %v646
        %v648 = vrot.slane %v647, 2
        %v649 = vmax.f32 %v647, %v648
        %v650 = vrot.slane %v649, 1
        %v651 = vmax.f32 %v649, %v650
        %v652 = vsel %vm539, %v595, -inf
        %v653 = vmax.f32 %v594, %v652
        %v654 = vrot.slane %v653, 4
        %v655 = vmax.f32 %v653, %v654
        %v656 = vrot.slane %v655, 2
        %v657 = vmax.f32 %v655, %v656
        %v658 = vrot.slane %v657, 1
        %v659 = vmax.f32 %v657, %v658
        %v660 = vld [vmem:[%s2] sm:$0x1]
        %v662 = vperm.slane %v660, 0
        %v664 = vadd.f32 %v603, %v662
        %v665 = vadd.f32 %v611, %v662
        %v666 = vadd.f32 %v619, %v662
        %v667 = vadd.f32 %v627, %v662
        %v668 = vadd.f32 %v635, %v662
        %v669 = vadd.f32 %v643, %v662
        %v670 = vadd.f32 %v651, %v662
        %v671 = vadd.f32 %v659, %v662
        %v672 = vmax.f32 %v664, 0.0
        %v673 = vmax.f32 %v665, 0.0
        %v674 = vmax.f32 %v666, 0.0
        %v675 = vmax.f32 %v667, 0.0
        %v676 = vmax.f32 %v668, 0.0
        %v677 = vmax.f32 %v669, 0.0
        %v678 = vmax.f32 %v670, 0.0
        %v679 = vmax.f32 %v671, 0.0
        %v688 = vrot.slane %v673, 7
        %vm689 = vcmask 1041409
        %v690 = vsel %vm689, %v688, %v672
        %v691 = vrot.slane %v674, 6
        %vm692 = vcmask 1042434
        %v693 = vsel %vm692, %v691, %v690
        %v694 = vrot.slane %v675, 5
        %vm695 = vcmask 1043459
        %v696 = vsel %vm695, %v694, %v693
        %v697 = vrot.slane %v676, 4
        %vm698 = vcmask 1044484
        %v699 = vsel %vm698, %v697, %v696
        %v700 = vrot.slane %v677, 3
        %vm701 = vcmask 1045509
        %v702 = vsel %vm701, %v700, %v699
        %v703 = vrot.slane %v678, 2
        %vm704 = vcmask 1046534
        %v705 = vsel %vm704, %v703, %v702
        %v706 = vrot.slane %v679, 1
        %vm707 = vcmask 1047559
        %v708 = vsel %vm707, %v706, %v705
        %710 = vst [vmem:[%s164] sm:$0xff] %v708
        %s711 = sand.u32 %s93, 1
        %s712 = scalar_lea.sflag [#allocation3], %s711
        %s713 = sand.u32 %s93, 1
        %s714 = smul.addr %s713, 8
        %s715 = scalar_lea.vmem [#allocation2], %s714
        // Predicated region
        $region33: #{tpu_custom_call.1} parent=31 // pred_check
          %p716 = pneg %p103
        $region34: #{tpu_custom_call.1} parent=31 // pred_check_branch
          %718 = sbr.rel (%p716) target = $region36
        $region35: #{tpu_custom_call.1} parent=31 // pred_region
          %720 = vsyncadd %s712, 0
          %s721 = smul.addr %s17, 8
          %s722 = scalar_lea.hbm %s3, %s721
          %s724 = sshll.u32 %s715, 4
          %s725 = int_to_ptr.vmem [resolvable:$true] %s724
          %s726 = sshll.u32 %s722, 4
          %s727 = int_to_ptr.hbm [resolvable:$true] %s726
          %729 = dma.vmem_to_hbm [thread:$0]  %s725, 128, %s727, %s712
        $region36: #{tpu_custom_call.1} parent=31 // pred_fallthru
          _
      $region32: #{tpu_custom_call.1} parent=5 // pred_fallthru
        _
      %p730 = scmp.le.s32.totalorder 2, %s12
      // Predicated region
      $region37: #{tpu_custom_call.1} parent=5 // pred_check
        %p731 = pneg %p730
      $region38: #{tpu_custom_call.1} parent=5 // pred_check_branch
        %733 = sbr.rel (%p731) target = $region40
      $region39: #{tpu_custom_call.1} parent=5 // pred_region
        %s734 = ssub.s32 %s12, 2
        // Predicated region
        $region41: #{tpu_custom_call.1} parent=39 // pred_check
          %p735 = pneg %p109
        $region42: #{tpu_custom_call.1} parent=39 // pred_check_branch
          %737 = sbr.rel (%p735) target = $region44
        $region43: #{tpu_custom_call.1} parent=39 // pred_region
          %s738 = sand.u32 %s94, 1
          %s739 = scalar_lea.sflag [#allocation3], %s738
          %s740 = sand.u32 %s94, 1
          %s741 = smul.addr %s740, 8
          %s742 = scalar_lea.vmem [#allocation2], %s741
          %744 = dma.done %s739, 128
        $region44: #{tpu_custom_call.1} parent=39 // pred_fallthru
          _
      $region40: #{tpu_custom_call.1} parent=5 // pred_fallthru
        _
    $region6: #{tpu_custom_call.1} parent=1 // loop_footer
      %s16 = sadd.s32 1, %s12
    $region7: #{tpu_custom_call.1} parent=1 // loop_footer_branch
      %11 = sbr.rel target = $region3
    $region8: #{tpu_custom_call.1} parent=1 // loop_exit
      _
    %745 = vsyncpa [#allocation3], 1
    %s746 = scalar_lea.sflag [#allocation3], 1
    %747 = vsyncpa %s746, 1

</llo_original>
